<compile_context>
chip_gen: v7x
topology: tpu7x:2x2x1
jax: 0.10.0
libtpu: 0.0.40
codegen_flags: <defaults>
</compile_context>

<pallas_src>
import jax
import jax.numpy as jnp
from jax.experimental import pallas as pl
from jax.experimental.pallas import tpu as pltpu


def _round_up(x, m):
    return (x + m - 1) // m * m


def domain_classifier_kernel(x_ref, y_ref, w_g_ref, w_y_ref, b_ref, out_ref):
    """One batch tile: out = x_flat @ W_g_tiled + nan_to_num(y) @ W_y + b."""
    # torch.nan_to_num(gt_label).float(): NaN -> 0, +/-inf -> +/-finfo.max (cheap VPU ops).
    y = y_ref[...].astype(jnp.float32)
    y = jnp.where(y != y, jnp.float32(0.0), y)              # NaN -> 0
    fmax = jnp.float32(jnp.finfo(jnp.float32).max)
    y = jnp.clip(y, -fmax, fmax)                            # +/-inf -> +/-max

    # Mean-pool + backend Linear + predictor(graph part) all folded into w_g_ref by
    # the wrapper, so this is a single K = N*F MXU contraction with f32 accumulation.
    out = (jnp.dot(x_ref[...], w_g_ref[...], preferred_element_type=jnp.float32)
           + jnp.dot(y, w_y_ref[...], preferred_element_type=jnp.float32)
           + b_ref[...])
    out_ref[...] = out.astype(out_ref.dtype)


def domain_classifier(x, gt_label, w_backend, b_backend, w_pred, b_pred, *, tb=None):
    """Forward pass of DomainClassifier with a synthetic (mean-pool + Linear) GNN backend.

    x: [B, N, F] node features, gt_label: [B, ...] -> reshaped to [B, num_task].
    If x arrives as bfloat16 the x stream (and the folded weight) stays bf16; the
    wrapper never casts x itself (that would be an extra full HBM pass).
    """
    B, N, F = x.shape
    NF = N * F
    backend_dim = w_backend.shape[1]
    num_domain = w_pred.shape[1]
    gt = jnp.reshape(gt_label, (B, -1)).astype(jnp.float32)
    num_task = gt.shape[1]
    assert w_pred.shape[0] == backend_dim + num_task

    # --- fold backend Linear + node mean-pool into the predictor's graph half. ---
    # TODO(synk): the real DrugOOD `backend` is a message-passing GNN; it is modeled here
    # as mean-pool + Linear, and the fold is only valid because that backend is linear.
    # TODO(synk): mean-pool divides by the static node count N; ragged/padded graphs need
    # a per-graph node-count mask instead.
    w_pred_g = w_pred[:backend_dim]                          # [backend_dim, C]
    w_pred_y = w_pred[backend_dim:].astype(jnp.float32)      # [num_task, C]
    w_g = jnp.dot(w_backend, w_pred_g)                       # [F, C]
    w_g_tiled = jnp.tile(w_g, (N, 1)) * (1.0 / N)            # [N*F, C]  (tiny; built once)
    b_fold = jnp.dot(b_backend, w_pred_g) + b_pred           # [1, C]

    if x.dtype == jnp.bfloat16:
        # Caller-supplied bf16 x: match the folded weight so both MXU operands are bf16.
        w_g_tiled = w_g_tiled.astype(jnp.bfloat16)
    x_flat = jnp.reshape(x, (B, NF))                         # free view of contiguous x
    x_itemsize = x_flat.dtype.itemsize

    # --- batch tile sizing: double-buffered x tile under a ~4 MiB/buffer budget
    #     (fits v7x's 64 MiB VMEM with lots of headroom) while aiming for >= 8 grid
    #     steps so megacore / dual-TC sharding and DMA pipelining have work to split. ---
    if tb is None:
        row_bytes = NF * x_itemsize
        tb_vmem = max(8, (4 * 1024 * 1024) // max(row_bytes, 1))
        tb_steps = _round_up(pl.cdiv(B, 8), 8)
        tb = min(tb_vmem, tb_steps, 2048)
    tb = max(8, (int(tb) // 8) * 8)
    tb = min(tb, _round_up(B, 8))
    grid = (pl.cdiv(B, tb),)   # ragged last tile; no jnp.pad pass over x

    # Exact working-set accounting (no hidden lane padding now that the minor dim is N*F).
    vmem_need = (2 * tb * NF * x_itemsize                     # double-buffered x tiles
                 + 2 * tb * num_task * 4                      # double-buffered y tiles
                 + NF * num_domain * w_g_tiled.dtype.itemsize # resident folded weight
                 + num_task * num_domain * 4 + num_domain * 4 # resident W_y, bias
                 + 2 * tb * num_domain * 4)                   # double-buffered out tiles
    vmem_limit = int(min(max(2 * vmem_need, 16 * 1024 * 1024), 48 * 1024 * 1024))

    cost = pl.CostEstimate(
        flops=int(2 * B * NF * num_domain + 2 * B * num_task * num_domain),
        transcendentals=0,
        bytes_accessed=int(x_flat.size * x_itemsize + gt.size * 4
                           + w_g_tiled.size * w_g_tiled.dtype.itemsize
                           + w_pred_y.size * 4 + b_fold.size * 4
                           + B * num_domain * 4),
    )

    out = pl.pallas_call(
        domain_classifier_kernel,
        out_shape=jax.ShapeDtypeStruct((B, num_domain), jnp.float32),
        grid=grid,
        in_specs=[
            pl.BlockSpec((tb, NF), lambda i: (i, 0)),             # x stream (lane-dense)
            pl.BlockSpec((tb, num_task), lambda i: (i, 0)),       # gt_label tile
            pl.BlockSpec((NF, num_domain), lambda i: (0, 0)),     # folded pool+backend+pred weight
            pl.BlockSpec((num_task, num_domain), lambda i: (0, 0)),  # predictor weight for y_part
            pl.BlockSpec((1, num_domain), lambda i: (0, 0)),      # folded bias
        ],
        out_specs=pl.BlockSpec((tb, num_domain), lambda i: (i, 0)),
        compiler_params=pltpu.CompilerParams(
            dimension_semantics=("parallel",),    # megacore / v7x dual-TC batch sharding
            vmem_limit_bytes=vmem_limit,
        ),
        cost_estimate=cost,
    )(x_flat, gt, w_g_tiled, w_pred_y, b_fold)

    return out


def domain_classifier_ref(x, gt_label, w_backend, b_backend, w_pred, b_pred):
    """Unfused pure-JAX mirror of the torch module (with the synthetic backend)."""
    B = x.shape[0]
    pooled = jnp.mean(x.astype(jnp.float32), axis=1)
    graph_feat = pooled @ w_backend + b_backend
    y_part = jnp.nan_to_num(jnp.reshape(gt_label, (B, -1)).astype(jnp.float32))
    feat = jnp.concatenate([graph_feat, y_part], axis=1)
    return feat @ w_pred + b_pred


if __name__ == "__main__":
    # Small, module-consistent shapes.
    B, N, F = 8, 16, 32          # graphs per batch, nodes per graph, node feature dim
    backend_dim = 32             # synthetic backend output width
    num_task = 8                 # width of gt_label after reshape
    num_domain = 4               # predictor output classes

    key = jax.random.PRNGKey(0)
    k_x, k_y, k_wb, k_bb, k_wp, k_bp = jax.random.split(key, 6)

    x = jax.random.normal(k_x, (B, N, F), dtype=jnp.float32)
    gt_label = jax.random.normal(k_y, (B, num_task), dtype=jnp.float32)
    # Inject NaNs so the torch.nan_to_num path is exercised.
    gt_label = gt_label.at[0, 0].set(jnp.nan).at[3, 2].set(jnp.nan)

    # Synthetic backend Linear(F -> backend_dim); predictor Linear(backend_dim+num_task -> num_domain).
    w_backend = jax.random.normal(k_wb, (F, backend_dim), dtype=jnp.float32) / jnp.sqrt(F)
    b_backend = 0.01 * jax.random.normal(k_bb, (1, backend_dim), dtype=jnp.float32)
    w_pred = jax.random.normal(
        k_wp, (backend_dim + num_task, num_domain), dtype=jnp.float32
    ) / jnp.sqrt(backend_dim + num_task)
    b_pred = 0.01 * jax.random.normal(k_bp, (1, num_domain), dtype=jnp.float32)

    ref = domain_classifier_ref(x, gt_label, w_backend, b_backend, w_pred, b_pred)

    # f32 path (math differs from the unfused ref only by wrapper-side weight folding).
    out = domain_classifier(x, gt_label, w_backend, b_backend, w_pred, b_pred)
    out = jax.block_until_ready(out)
    assert out.shape == (B, num_domain)
    assert jnp.allclose(out, ref, atol=1e-4, rtol=1e-4), float(jnp.max(jnp.abs(out - ref)))

    # Caller-supplied bf16 x (the wrapper itself never casts x): half HBM bytes on the
    # dominant stream, f32 MXU accumulation; logits differ at the ~1e-2 level.
    out_bf16 = domain_classifier(x.astype(jnp.bfloat16), gt_label,
                                 w_backend, b_backend, w_pred, b_pred)
    out_bf16 = jax.block_until_ready(out_bf16)
    assert jnp.allclose(out_bf16, ref, atol=3e-2, rtol=3e-2)

    print("KERNEL_OK")
</pallas_src>

<mosaic_0001>
module attributes {stable_mosaic.version = 11 : i64} {
  func.func @domain_classifier_kernel(%arg0: i32, %arg1: memref<8x512xf32, #tpu.memory_space<vmem>>, %arg2: memref<8x8xf32, #tpu.memory_space<vmem>>, %arg3: memref<512x4xf32, #tpu.memory_space<vmem>>, %arg4: memref<8x4xf32, #tpu.memory_space<vmem>>, %arg5: memref<1x4xf32, #tpu.memory_space<vmem>>, %arg6: memref<8x4xf32, #tpu.memory_space<vmem>>) attributes {dimension_semantics = [#tpu.dimension_semantics<parallel>], iteration_bounds = array<i64: 1>, scalar_prefetch = 0 : i64, scratch_operands = 0 : i64, tpu.core_type = #tpu.core_type<tc>, window_params = [{transform_indices = @transform_0, window_bounds = array<i64: 8, 512>}, {transform_indices = @transform_1, window_bounds = array<i64: 8, 8>}, {pipeline_mode = #tpu.pipeline_mode<synchronous>, transform_indices = @transform_2, window_bounds = array<i64: 512, 4>}, {pipeline_mode = #tpu.pipeline_mode<synchronous>, transform_indices = @transform_3, window_bounds = array<i64: 8, 4>}, {pipeline_mode = #tpu.pipeline_mode<synchronous>, transform_indices = @transform_4, window_bounds = array<i64: 1, 4>}, {transform_indices = @transform_5, window_bounds = array<i64: 8, 4>}]} {
    %c0 = arith.constant 0 : index
    %c0_0 = arith.constant 0 : index
    %0 = vector.load %arg2[%c0, %c0_0] : memref<8x8xf32, #tpu.memory_space<vmem>>, vector<8x8xf32>
    %1 = arith.cmpf one, %0, %0 : vector<8x8xf32>
    %cst = arith.constant 0.000000e+00 : f32
    %2 = vector.broadcast %cst : f32 to vector<8x8xf32>
    %3 = arith.select %1, %2, %0 : vector<8x8xi1>, vector<8x8xf32>
    %cst_1 = arith.constant 0.000000e+00 : f32
    %cst_2 = arith.constant 3.40282347E+38 : f32
    %4 = arith.subf %cst_1, %cst_2 : f32
    %cst_3 = arith.constant 3.40282347E+38 : f32
    %5 = vector.broadcast %4 : f32 to vector<8x8xf32>
    %6 = arith.maximumf %5, %3 : vector<8x8xf32>
    %7 = vector.broadcast %cst_3 : f32 to vector<8x8xf32>
    %8 = arith.minimumf %7, %6 : vector<8x8xf32>
    %c0_4 = arith.constant 0 : index
    %c0_5 = arith.constant 0 : index
    %9 = vector.load %arg1[%c0_4, %c0_5] : memref<8x512xf32, #tpu.memory_space<vmem>>, vector<8x512xf32>
    %c0_6 = arith.constant 0 : index
    %c0_7 = arith.constant 0 : index
    %10 = vector.load %arg3[%c0_6, %c0_7] : memref<512x4xf32, #tpu.memory_space<vmem>>, vector<512x4xf32>
    %cst_8 = arith.constant dense<0.000000e+00> : vector<8x4xf32>
    %11 = tpu.matmul %9, %10, %cst_8 {dimension_numbers = #tpu.dot_dimension_numbers<[1], [0], [0], [1], [0, 0, 1, 1], [], []>} : vector<8x512xf32>, vector<512x4xf32>, vector<8x4xf32> -> vector<8x4xf32>
    %c0_9 = arith.constant 0 : index
    %c0_10 = arith.constant 0 : index
    %12 = vector.load %arg4[%c0_9, %c0_10] : memref<8x4xf32, #tpu.memory_space<vmem>>, vector<8x4xf32>
    %cst_11 = arith.constant dense<0.000000e+00> : vector<8x4xf32>
    %13 = tpu.matmul %8, %12, %cst_11 {dimension_numbers = #tpu.dot_dimension_numbers<[1], [0], [0], [1], [0, 0, 1, 1], [], []>} : vector<8x8xf32>, vector<8x4xf32>, vector<8x4xf32> -> vector<8x4xf32>
    %14 = arith.addf %11, %13 : vector<8x4xf32>
    %c0_12 = arith.constant 0 : index
    %c0_13 = arith.constant 0 : index
    %15 = vector.load %arg5[%c0_12, %c0_13] : memref<1x4xf32, #tpu.memory_space<vmem>>, vector<1x4xf32>
    %16 = vector.broadcast %15 : vector<1x4xf32> to vector<8x4xf32>
    %17 = arith.addf %14, %16 : vector<8x4xf32>
    %c0_14 = arith.constant 0 : index
    %c0_15 = arith.constant 0 : index
    %18 = vector.load %arg6[%c0_14, %c0_15] : memref<8x4xf32, #tpu.memory_space<vmem>>, vector<8x4xf32>
    tpu.vector_store %arg6[%c0_14, %c0_15], %17 {strides = array<i32>} : memref<8x4xf32, #tpu.memory_space<vmem>>, vector<8x4xf32>,
    return
  }
  func.func @transform_0(%arg0: i32) -> (i32, i32) {
    %c0_i32 = arith.constant 0 : i32
    %c0_i32_0 = arith.constant 0 : i32
    return %arg0, %c0_i32 : i32, i32
  }
  func.func @transform_1(%arg0: i32) -> (i32, i32) {
    %c0_i32 = arith.constant 0 : i32
    %c0_i32_0 = arith.constant 0 : i32
    return %arg0, %c0_i32 : i32, i32
  }
  func.func @transform_2(%arg0: i32) -> (i32, i32) {
    %c0_i32 = arith.constant 0 : i32
    %c0_i32_0 = arith.constant 0 : i32
    %c0_i32_1 = arith.constant 0 : i32
    return %c0_i32, %c0_i32_0 : i32, i32
  }
  func.func @transform_3(%arg0: i32) -> (i32, i32) {
    %c0_i32 = arith.constant 0 : i32
    %c0_i32_0 = arith.constant 0 : i32
    %c0_i32_1 = arith.constant 0 : i32
    return %c0_i32, %c0_i32_0 : i32, i32
  }
  func.func @transform_4(%arg0: i32) -> (i32, i32) {
    %c0_i32 = arith.constant 0 : i32
    %c0_i32_0 = arith.constant 0 : i32
    %c0_i32_1 = arith.constant 0 : i32
    return %c0_i32, %c0_i32_0 : i32, i32
  }
  func.func @transform_5(%arg0: i32) -> (i32, i32) {
    %c0_i32 = arith.constant 0 : i32
    %c0_i32_0 = arith.constant 0 : i32
    return %arg0, %c0_i32 : i32, i32
  }
}

</mosaic_0001>

<llo_original>
// kernel: tpu_custom_call.1
$region0: #{tpu_custom_call.1}
  #allocation0 [shape = 'u32[]', space=smem, size = 0x4, offset = 0x4, fixed_abs, tag = 'smem constant byte address 0x4 - core index']
  #allocation1 [shape = 'u32[144,128]{1,0:T(1,128)}', space=vmem, size = 0x12000, scoped, tag = 'internal scratch']
  %s0 = inlined_call_operand.vmem [shape: f32[8,512], index: 0, kind: input, shape index: {}]
  %s1 = inlined_call_operand.vmem [shape: f32[8,8], index: 1, kind: input, shape index: {}]
  %s2 = inlined_call_operand.vmem [shape: f32[512,4], index: 2, kind: input, shape index: {}]
  %s3 = inlined_call_operand.vmem [shape: f32[8,4], index: 3, kind: input, shape index: {}]
  %s4 = inlined_call_operand.vmem [shape: f32[1,4], index: 4, kind: input, shape index: {}]
  %s5 = inlined_call_operand.vmem [shape: f32[8,4], index: 5, kind: output, shape index: {}]
  %s6 = sld [smem:[#allocation0]]
  $region30: #{tpu_custom_call.1} parent=0
    _
  %s8 = ssub.s32 1, %s6
  %s9 = scalar_select 0, %s8, %s6
  // Predicated region
  $region2: #{tpu_custom_call.1} parent=0 // pred_check
    _
  $region3: #{tpu_custom_call.1} parent=0 // pred_check_branch
    %11 = sbr.rel (0) target = $region5
  $region4: #{tpu_custom_call.1} parent=0 // pred_region
    _
  $region5: #{tpu_custom_call.1} parent=0 // pred_fallthru
    _
  // Predicated region
  $region6: #{tpu_custom_call.1} parent=0 // pred_check
    _
  $region7: #{tpu_custom_call.1} parent=0 // pred_check_branch
    %13 = sbr.rel (0) target = $region9
  $region8: #{tpu_custom_call.1} parent=0 // pred_region
    _
  $region9: #{tpu_custom_call.1} parent=0 // pred_fallthru
    _
  // Predicated region
  $region10: #{tpu_custom_call.1} parent=0 // pred_check
    _
  $region11: #{tpu_custom_call.1} parent=0 // pred_check_branch
    %15 = sbr.rel (0) target = $region13
  $region12: #{tpu_custom_call.1} parent=0 // pred_region
    _
  $region13: #{tpu_custom_call.1} parent=0 // pred_fallthru
    _
  // Predicated region
  $region14: #{tpu_custom_call.1} parent=0 // pred_check
    _
  $region15: #{tpu_custom_call.1} parent=0 // pred_check_branch
    %17 = sbr.rel (0) target = $region17
  $region16: #{tpu_custom_call.1} parent=0 // pred_region
    _
  $region17: #{tpu_custom_call.1} parent=0 // pred_fallthru
    _
  // Predicated region
  $region18: #{tpu_custom_call.1} parent=0 // pred_check
    _
  $region19: #{tpu_custom_call.1} parent=0 // pred_check_branch
    %19 = sbr.rel (0) target = $region21
  $region20: #{tpu_custom_call.1} parent=0 // pred_region
    _
  $region21: #{tpu_custom_call.1} parent=0 // pred_fallthru
    _
  %v20 = vld [vmem:[%s1] sm:$0xff]
  %vm21 = vcmp.ne.f32.partialorder %v20, %v20
  %v22 = vsel %vm21, 0.0, %v20
  %v23 = vmax.f32 %v22, -3.4028235e+38
  %v24 = vmin.f32 %v23, 3.4028235e+38
  %v25 = vld [vmem:[%s0] sm:$0xff]
  %v26 = vld [vmem:[%s0 + $0x8] sm:$0xff]
  %v27 = vld [vmem:[%s0 + $0x10] sm:$0xff]
  %v28 = vld [vmem:[%s0 + $0x18] sm:$0xff]
  %v29 = vld [vmem:[%s2] sm:$0xff]
  %v30 = vld [vmem:[%s2 + $0x8] sm:$0xff]
  %v31 = vld [vmem:[%s2 + $0x10] sm:$0xff]
  %v32 = vld [vmem:[%s2 + $0x18] sm:$0xff]
  %v33 = vld [vmem:[%s2 + $0x20] sm:$0xff]
  %v34 = vld [vmem:[%s2 + $0x28] sm:$0xff]
  %v35 = vld [vmem:[%s2 + $0x30] sm:$0xff]
  %v36 = vld [vmem:[%s2 + $0x38] sm:$0xff]
  %v37 = vld [vmem:[%s2 + $0x40] sm:$0xff]
  %v38 = vld [vmem:[%s2 + $0x48] sm:$0xff]
  %v39 = vld [vmem:[%s2 + $0x50] sm:$0xff]
  %v40 = vld [vmem:[%s2 + $0x58] sm:$0xff]
  %v41 = vld [vmem:[%s2 + $0x60] sm:$0xff]
  %v42 = vld [vmem:[%s2 + $0x68] sm:$0xff]
  %v43 = vld [vmem:[%s2 + $0x70] sm:$0xff]
  %v44 = vld [vmem:[%s2 + $0x78] sm:$0xff]
  %v45 = vld [vmem:[%s2 + $0x80] sm:$0xff]
  %v46 = vld [vmem:[%s2 + $0x88] sm:$0xff]
  %v47 = vld [vmem:[%s2 + $0x90] sm:$0xff]
  %v48 = vld [vmem:[%s2 + $0x98] sm:$0xff]
  %v49 = vld [vmem:[%s2 + $0xa0] sm:$0xff]
  %v50 = vld [vmem:[%s2 + $0xa8] sm:$0xff]
  %v51 = vld [vmem:[%s2 + $0xb0] sm:$0xff]
  %v52 = vld [vmem:[%s2 + $0xb8] sm:$0xff]
  %v53 = vld [vmem:[%s2 + $0xc0] sm:$0xff]
  %v54 = vld [vmem:[%s2 + $0xc8] sm:$0xff]
  %v55 = vld [vmem:[%s2 + $0xd0] sm:$0xff]
  %v56 = vld [vmem:[%s2 + $0xd8] sm:$0xff]
  %v57 = vld [vmem:[%s2 + $0xe0] sm:$0xff]
  %v58 = vld [vmem:[%s2 + $0xe8] sm:$0xff]
  %v59 = vld [vmem:[%s2 + $0xf0] sm:$0xff]
  %v60 = vld [vmem:[%s2 + $0xf8] sm:$0xff]
  %v61 = vld [vmem:[%s2 + $0x100] sm:$0xff]
  %v62 = vld [vmem:[%s2 + $0x108] sm:$0xff]
  %v63 = vld [vmem:[%s2 + $0x110] sm:$0xff]
  %v64 = vld [vmem:[%s2 + $0x118] sm:$0xff]
  %v65 = vld [vmem:[%s2 + $0x120] sm:$0xff]
  %v66 = vld [vmem:[%s2 + $0x128] sm:$0xff]
  %v67 = vld [vmem:[%s2 + $0x130] sm:$0xff]
  %v68 = vld [vmem:[%s2 + $0x138] sm:$0xff]
  %v69 = vld [vmem:[%s2 + $0x140] sm:$0xff]
  %v70 = vld [vmem:[%s2 + $0x148] sm:$0xff]
  %v71 = vld [vmem:[%s2 + $0x150] sm:$0xff]
  %v72 = vld [vmem:[%s2 + $0x158] sm:$0xff]
  %v73 = vld [vmem:[%s2 + $0x160] sm:$0xff]
  %v74 = vld [vmem:[%s2 + $0x168] sm:$0xff]
  %v75 = vld [vmem:[%s2 + $0x170] sm:$0xff]
  %v76 = vld [vmem:[%s2 + $0x178] sm:$0xff]
  %v77 = vld [vmem:[%s2 + $0x180] sm:$0xff]
  %v78 = vld [vmem:[%s2 + $0x188] sm:$0xff]
  %v79 = vld [vmem:[%s2 + $0x190] sm:$0xff]
  %v80 = vld [vmem:[%s2 + $0x198] sm:$0xff]
  %v81 = vld [vmem:[%s2 + $0x1a0] sm:$0xff]
  %v82 = vld [vmem:[%s2 + $0x1a8] sm:$0xff]
  %v83 = vld [vmem:[%s2 + $0x1b0] sm:$0xff]
  %v84 = vld [vmem:[%s2 + $0x1b8] sm:$0xff]
  %v85 = vld [vmem:[%s2 + $0x1c0] sm:$0xff]
  %v86 = vld [vmem:[%s2 + $0x1c8] sm:$0xff]
  %v87 = vld [vmem:[%s2 + $0x1d0] sm:$0xff]
  %v88 = vld [vmem:[%s2 + $0x1d8] sm:$0xff]
  %v89 = vld [vmem:[%s2 + $0x1e0] sm:$0xff]
  %v90 = vld [vmem:[%s2 + $0x1e8] sm:$0xff]
  %v91 = vld [vmem:[%s2 + $0x1f0] sm:$0xff]
  %v92 = vld [vmem:[%s2 + $0x1f8] sm:$0xff]
  %v93 = vld [vmem:[%s3] sm:$0xff]
  %vm94 = vcmask 64512
  %v96 = vsel %vm94, %v24, 0
  %98 = vmatprep.subr.mxu0 0.0
  %99 = vmatpush1.msra.mxu0 %v93
  %100 = vmatprep.subr.mxu0 0.0
  %101 = vmatpush1.msra.mxu0 0.0
  %102 = vmatprep.subr.mxu0 0.0
  %103 = vmatpush1.msra.mxu0 0.0
  %104 = vmatprep.subr.mxu0 0.0
  %105 = vmatpush1.msra.mxu0 0.0
  %106 = vmatprep.subr.mxu0 0.0
  %107 = vmatpush1.msra.mxu0 0.0
  %108 = vmatprep.subr.mxu0 0.0
  %109 = vmatpush1.msra.mxu0 0.0
  %110 = vmatprep.subr.mxu0 0.0
  %111 = vmatpush1.msra.mxu0 0.0
  %112 = vmatprep.subr.mxu0 0.0
  %113 = vmatpush1.msra.mxu0 0.0
  %114 = vmatprep.subr.mxu0 0.0
  %115 = vmatpush1.msra.mxu0 0.0
  %116 = vmatprep.subr.mxu0 0.0
  %117 = vmatpush1.msra.mxu0 0.0
  %118 = vmatprep.subr.mxu0 0.0
  %119 = vmatpush1.msra.mxu0 0.0
  %120 = vmatprep.subr.mxu0 0.0
  %121 = vmatpush1.msra.mxu0 0.0
  %122 = vmatprep.subr.mxu0 0.0
  %123 = vmatpush1.msra.mxu0 0.0
  %124 = vmatprep.subr.mxu0 0.0
  %125 = vmatpush1.msra.mxu0 0.0
  %126 = vmatprep.subr.mxu0 0.0
  %127 = vmatpush1.msra.mxu0 0.0
  %128 = vmatprep.subr.mxu0 0.0
  %129 = vmatpush1.msra.mxu0 0.0
  %130 = vmatprep.subr.mxu0 0.0
  %131 = vmatpush1.msra.mxu0 0.0
  %132 = vmatprep.subr.mxu0 0.0
  %133 = vmatpush1.msra.mxu0 0.0
  %134 = vmatprep.subr.mxu0 0.0
  %135 = vmatpush1.msra.mxu0 0.0
  %136 = vmatprep.subr.mxu0 0.0
  %137 = vmatpush1.msra.mxu0 0.0
  %138 = vmatprep.subr.mxu0 0.0
  %139 = vmatpush1.msra.mxu0 0.0
  %140 = vmatprep.subr.mxu0 0.0
  %141 = vmatpush1.msra.mxu0 0.0
  %142 = vmatprep.subr.mxu0 0.0
  %143 = vmatpush1.msra.mxu0 0.0
  %144 = vmatprep.subr.mxu0 0.0
  %145 = vmatpush1.msra.mxu0 0.0
  %146 = vmatprep.subr.mxu0 0.0
  %147 = vmatpush1.msra.mxu0 0.0
  %148 = vmatprep.subr.mxu0 0.0
  %149 = vmatpush1.msra.mxu0 0.0
  %150 = vmatprep.subr.mxu0 0.0
  %151 = vmatpush1.msra.mxu0 0.0
  %152 = vmatprep.subr.mxu0 0.0
  %153 = vmatpush1.msra.mxu0 0.0
  %154 = vmatprep.subr.mxu0 0.0
  %155 = vmatpush1.msra.mxu0 0.0
  %156 = vmatprep.subr.mxu0 0.0
  %157 = vmatpush1.msra.mxu0 0.0
  %158 = vmatprep.subr.mxu0 0.0
  %159 = vmatpush1.msra.mxu0 0.0
  %160 = vmatprep.subr.mxu0 0.0
  %161 = vmatpush1.msra.mxu0 0.0
  %162 = vmatprep.mubr.f32.mxu0 0.0
  %163 = vmatmul.mubr.f32.gmra.mrb[0].mxu0 %v96
  %v164 = vpop.f32.mrb[0].mxu0
  %v165 = vadd.f32 0.0, %v164
  %v166 = vpop.f32.mrb[0].mxu0
  %167 = vdwg.mxu0
  %168 = vmatprep.subr.mxu0 0.0
  %169 = vmatpush1.msra.mxu0 %v29
  %170 = vmatprep.subr.mxu0 0.0
  %171 = vmatpush1.msra.mxu0 %v30
  %172 = vmatprep.subr.mxu0 0.0
  %173 = vmatpush1.msra.mxu0 %v31
  %174 = vmatprep.subr.mxu0 0.0
  %175 = vmatpush1.msra.mxu0 %v32
  %176 = vmatprep.subr.mxu0 0.0
  %177 = vmatpush1.msra.mxu0 %v33
  %178 = vmatprep.subr.mxu0 0.0
  %179 = vmatpush1.msra.mxu0 %v34
  %180 = vmatprep.subr.mxu0 0.0
  %181 = vmatpush1.msra.mxu0 %v35
  %182 = vmatprep.subr.mxu0 0.0
  %183 = vmatpush1.msra.mxu0 %v36
  %184 = vmatprep.subr.mxu0 0.0
  %185 = vmatpush1.msra.mxu0 %v37
  %186 = vmatprep.subr.mxu0 0.0
  %187 = vmatpush1.msra.mxu0 %v38
  %188 = vmatprep.subr.mxu0 0.0
  %189 = vmatpush1.msra.mxu0 %v39
  %190 = vmatprep.subr.mxu0 0.0
  %191 = vmatpush1.msra.mxu0 %v40
  %192 = vmatprep.subr.mxu0 0.0
  %193 = vmatpush1.msra.mxu0 %v41
  %194 = vmatprep.subr.mxu0 0.0
  %195 = vmatpush1.msra.mxu0 %v42
  %196 = vmatprep.subr.mxu0 0.0
  %197 = vmatpush1.msra.mxu0 %v43
  %198 = vmatprep.subr.mxu0 0.0
  %199 = vmatpush1.msra.mxu0 %v44
  %200 = vmatprep.subr.mxu0 0.0
  %201 = vmatpush1.msra.mxu0 %v45
  %202 = vmatprep.subr.mxu0 0.0
  %203 = vmatpush1.msra.mxu0 %v46
  %204 = vmatprep.subr.mxu0 0.0
  %205 = vmatpush1.msra.mxu0 %v47
  %206 = vmatprep.subr.mxu0 0.0
  %207 = vmatpush1.msra.mxu0 %v48
  %208 = vmatprep.subr.mxu0 0.0
  %209 = vmatpush1.msra.mxu0 %v49
  %210 = vmatprep.subr.mxu0 0.0
  %211 = vmatpush1.msra.mxu0 %v50
  %212 = vmatprep.subr.mxu0 0.0
  %213 = vmatpush1.msra.mxu0 %v51
  %214 = vmatprep.subr.mxu0 0.0
  %215 = vmatpush1.msra.mxu0 %v52
  %216 = vmatprep.subr.mxu0 0.0
  %217 = vmatpush1.msra.mxu0 %v53
  %218 = vmatprep.subr.mxu0 0.0
  %219 = vmatpush1.msra.mxu0 %v54
  %220 = vmatprep.subr.mxu0 0.0
  %221 = vmatpush1.msra.mxu0 %v55
  %222 = vmatprep.subr.mxu0 0.0
  %223 = vmatpush1.msra.mxu0 %v56
  %224 = vmatprep.subr.mxu0 0.0
  %225 = vmatpush1.msra.mxu0 %v57
  %226 = vmatprep.subr.mxu0 0.0
  %227 = vmatpush1.msra.mxu0 %v58
  %228 = vmatprep.subr.mxu0 0.0
  %229 = vmatpush1.msra.mxu0 %v59
  %230 = vmatprep.subr.mxu0 0.0
  %231 = vmatpush1.msra.mxu0 %v60
  %232 = vmatprep.mubr.f32.mxu0 %v26
  %233 = vmatmul.mubr.f32.gmra.mrb[0].mxu0 %v25
  %v234 = vpop.f32.mrb[0].mxu0
  %v235 = vadd.f32 %v165, %v234
  %v236 = vpop.f32.mrb[0].mxu0
  %237 = vdwg.mxu0
  %238 = vmatprep.subr.mxu0 0.0
  %239 = vmatpush1.msra.mxu0 %v61
  %240 = vmatprep.subr.mxu0 0.0
  %241 = vmatpush1.msra.mxu0 %v62
  %242 = vmatprep.subr.mxu0 0.0
  %243 = vmatpush1.msra.mxu0 %v63
  %244 = vmatprep.subr.mxu0 0.0
  %245 = vmatpush1.msra.mxu0 %v64
  %246 = vmatprep.subr.mxu0 0.0
  %247 = vmatpush1.msra.mxu0 %v65
  %248 = vmatprep.subr.mxu0 0.0
  %249 = vmatpush1.msra.mxu0 %v66
  %250 = vmatprep.subr.mxu0 0.0
  %251 = vmatpush1.msra.mxu0 %v67
  %252 = vmatprep.subr.mxu0 0.0
  %253 = vmatpush1.msra.mxu0 %v68
  %254 = vmatprep.subr.mxu0 0.0
  %255 = vmatpush1.msra.mxu0 %v69
  %256 = vmatprep.subr.mxu0 0.0
  %257 = vmatpush1.msra.mxu0 %v70
  %258 = vmatprep.subr.mxu0 0.0
  %259 = vmatpush1.msra.mxu0 %v71
  %260 = vmatprep.subr.mxu0 0.0
  %261 = vmatpush1.msra.mxu0 %v72
  %262 = vmatprep.subr.mxu0 0.0
  %263 = vmatpush1.msra.mxu0 %v73
  %264 = vmatprep.subr.mxu0 0.0
  %265 = vmatpush1.msra.mxu0 %v74
  %266 = vmatprep.subr.mxu0 0.0
  %267 = vmatpush1.msra.mxu0 %v75
  %268 = vmatprep.subr.mxu0 0.0
  %269 = vmatpush1.msra.mxu0 %v76
  %270 = vmatprep.subr.mxu0 0.0
  %271 = vmatpush1.msra.mxu0 %v77
  %272 = vmatprep.subr.mxu0 0.0
  %273 = vmatpush1.msra.mxu0 %v78
  %274 = vmatprep.subr.mxu0 0.0
  %275 = vmatpush1.msra.mxu0 %v79
  %276 = vmatprep.subr.mxu0 0.0
  %277 = vmatpush1.msra.mxu0 %v80
  %278 = vmatprep.subr.mxu0 0.0
  %279 = vmatpush1.msra.mxu0 %v81
  %280 = vmatprep.subr.mxu0 0.0
  %281 = vmatpush1.msra.mxu0 %v82
  %282 = vmatprep.subr.mxu0 0.0
  %283 = vmatpush1.msra.mxu0 %v83
  %284 = vmatprep.subr.mxu0 0.0
  %285 = vmatpush1.msra.mxu0 %v84
  %286 = vmatprep.subr.mxu0 0.0
  %287 = vmatpush1.msra.mxu0 %v85
  %288 = vmatprep.subr.mxu0 0.0
  %289 = vmatpush1.msra.mxu0 %v86
  %290 = vmatprep.subr.mxu0 0.0
  %291 = vmatpush1.msra.mxu0 %v87
  %292 = vmatprep.subr.mxu0 0.0
  %293 = vmatpush1.msra.mxu0 %v88
  %294 = vmatprep.subr.mxu0 0.0
  %295 = vmatpush1.msra.mxu0 %v89
  %296 = vmatprep.subr.mxu0 0.0
  %297 = vmatpush1.msra.mxu0 %v90
  %298 = vmatprep.subr.mxu0 0.0
  %299 = vmatpush1.msra.mxu0 %v91
  %300 = vmatprep.subr.mxu0 0.0
  %301 = vmatpush1.msra.mxu0 %v92
  %302 = vmatprep.mubr.f32.mxu0 %v28
  %303 = vmatmul.mubr.f32.gmra.mrb[0].mxu0 %v27
  %v304 = vpop.f32.mrb[0].mxu0
  %v305 = vadd.f32 %v235, %v304
  %v306 = vpop.f32.mrb[0].mxu0
  %307 = vdwg.mxu0
  %v308 = vld [vmem:[%s4] sm:$0x1]
  %v310 = vlaneseq
  %v311 = vshrl.u32 %v310, 7
  %v312 = vsub.s32 0, %v311
  %v313 = vrot.slane %v308, %v312
  %v315 = vadd.f32 %v305, %v313
  %vm316 = vcmask 31744
  %317 = vst.msk [vmem:[%s5] sm:$0xff] %vm316, %v315
  // Predicated region
  $region22: #{tpu_custom_call.1} parent=0 // pred_check
    _
  $region23: #{tpu_custom_call.1} parent=0 // pred_check_branch
    %319 = sbr.rel (0) target = $region25
  $region24: #{tpu_custom_call.1} parent=0 // pred_region
    _
  $region25: #{tpu_custom_call.1} parent=0 // pred_fallthru
    _
  // Predicated region
  $region26: #{tpu_custom_call.1} parent=0 // pred_check
    _
  $region27: #{tpu_custom_call.1} parent=0 // pred_check_branch
    %321 = sbr.rel (0) target = $region29
  $region28: #{tpu_custom_call.1} parent=0 // pred_region
    _
  $region29: #{tpu_custom_call.1} parent=0 // pred_fallthru
    _

</llo_original>
